<compile_context>
chip_gen: v7x
topology: tpu7x:2x2x1
jax: 0.10.0
libtpu: 0.0.40
codegen_flags: <defaults>
</compile_context>

<pallas_src>
import functools

import jax
import jax.numpy as jnp
from jax.experimental import pallas as pl
from jax.experimental.pallas import tpu as pltpu


def _mlp_kernel(num_layers, *refs):
    """refs = (x_ref, w0, b0, ..., w_{L-1}, b_{L-1}, outT_ref).

    x_ref  : [TN, in_channels] tile in the input's native layout.
    w_i    : [fan_out, fan_in]  (PyTorch nn.Linear layout) -> h' = W @ h.
    b_i    : [fan_out, 1]       (broadcasts along the batch lanes).
    outT   : [out_dim, TN]      lane-dense output tile (batch on the lane axis).
    """
    x_ref = refs[0]
    outT_ref = refs[-1]
    wb_refs = refs[1:-1]

    # In-kernel transpose: [TN, C_in] -> [C_in, TN]. XLU work, hidden under DMA.
    h = jnp.transpose(x_ref[...]).astype(jnp.float32)

    # Small, fixed layer count -> fully unrolled for LLO scheduling visibility.
    for layer in range(num_layers):
        w_ref = wb_refs[2 * layer]
        b = wb_refs[2 * layer + 1][...]                          # [C_out, 1]
        w = w_ref[...]                                           # [C_out, C_in]
        last = layer == num_layers - 1
        if last and w_ref.shape[0] == 1:
            # 1-row output: VPU broadcast-multiply + XLU sublane reduce instead
            # of a nearly-empty MXU matmul.
            acc = jnp.sum(jnp.transpose(w) * h, axis=0, keepdims=True) + b
        else:
            acc = jnp.dot(w, h, preferred_element_type=jnp.float32) + b
        if not last:
            acc = jnp.maximum(acc, 0.0)                          # ReLU
            # dropout(p, training=False) -> identity
        h = acc
    outT_ref[...] = jax.nn.sigmoid(h).astype(outT_ref.dtype)


def link_predictor_forward(x, weights, biases, *, block_rows=32768):
    """x: [N, in_channels]; weights[i]: [fan_out_i, fan_in_i] (PyTorch layout);
    biases[i]: [fan_out_i, 1]. Returns sigmoid(MLP(x)) as [N, out_channels] f32."""
    num_layers = len(weights)
    n, in_channels = x.shape
    out_dim = weights[-1].shape[0]
    hidden_max = max(w.shape[0] for w in weights)

    # Generation-aware VMEM capacity (v5e/v6e: 128 MiB, v7x: 64 MiB).
    try:
        vmem_cap = int(pltpu.get_tpu_info().vmem_capacity_bytes)
    except Exception:
        vmem_cap = 64 << 20  # conservative fallback (v7x)

    # Per-batch-column VMEM footprint: double-buffered x tile + out tile, plus
    # the f32 transposed-x and hidden intermediates inside the kernel body.
    x_itemsize = jnp.dtype(x.dtype).itemsize
    per_col = (2 * in_channels * x_itemsize
               + 2 * out_dim * 4
               + 2 * (in_channels + hidden_max) * 4)
    param_bytes = sum(w.size * 4 + b.size * 4 for w, b in zip(weights, biases))

    # Clamp TN so tiles stay within ~60% of physical VMEM (headroom for scratch).
    budget = int(vmem_cap * 0.6) - 2 * param_bytes
    tn_cap_vmem = max(128, (budget // per_col) // 128 * 128)

    tn = max(128, (int(block_rows) // 128) * 128)
    tn = min(tn, tn_cap_vmem)
    tn = min(tn, pl.cdiv(n, 128) * 128)            # no bigger than the padded batch
    if n > 128:
        # Guarantee >= 2 grid steps when possible so both v7x TensorCores get work.
        tn = min(tn, pl.cdiv(pl.cdiv(n, 2), 128) * 128)
    n_pad = pl.cdiv(n, tn) * tn
    grid = (n_pad // tn,)

    kernel = functools.partial(_mlp_kernel, num_layers)

    vmem = pltpu.MemorySpace.VMEM
    # x streamed in native [N, C] layout; batch tiled along rows, full feature dim.
    in_specs = [pl.BlockSpec((tn, in_channels), lambda i: (i, 0), memory_space=vmem)]
    args = [x]
    for w, b in zip(weights, biases):
        # Full-array blocks with constant index_map: weights/biases are fetched
        # once and remain VMEM-resident across every batch-grid iteration.
        in_specs.append(pl.BlockSpec(w.shape, lambda i: (0, 0), memory_space=vmem))
        in_specs.append(pl.BlockSpec(b.shape, lambda i: (0, 0), memory_space=vmem))
        args.append(w)
        args.append(b)
    # Lane-dense [out_dim, TN] output tile (unmasked vst), batch on the lane axis.
    out_spec = pl.BlockSpec((out_dim, tn), lambda i: (0, i), memory_space=vmem)

    needed = per_col * tn + 2 * param_bytes + (4 << 20)
    vmem_limit = int(min(max(needed, 32 << 20), int(vmem_cap * 0.8)))

    outT = pl.pallas_call(
        kernel,
        out_shape=jax.ShapeDtypeStruct((out_dim, n_pad), jnp.float32),
        grid=grid,
        in_specs=in_specs,
        out_specs=out_spec,
        compiler_params=pltpu.CompilerParams(
            dimension_semantics=("parallel",),   # megacore sharding on v7x
            vmem_limit_bytes=vmem_limit),
    )(*args)

    # Padded columns (>= n) carry independent garbage-through-sigmoid values and
    # are discarded here; never reuse them.
    return outT[:, :n].T


def init_params(key, in_channels, hidden_channels, out_channels, num_layers):
    """Deterministic init mirroring nn.Linear default (U(-1/sqrt(fan_in), 1/sqrt(fan_in))).
    Weights in PyTorch layout [fan_out, fan_in]; biases as [fan_out, 1]."""
    dims = [in_channels] + [hidden_channels] * (num_layers - 1) + [out_channels]
    weights, biases = [], []
    for i in range(num_layers):
        fan_in, fan_out = dims[i], dims[i + 1]
        key, kw, kb = jax.random.split(key, 3)
        bound = 1.0 / (fan_in ** 0.5)
        weights.append(jax.random.uniform(kw, (fan_out, fan_in), jnp.float32,
                                          minval=-bound, maxval=bound))
        biases.append(jax.random.uniform(kb, (fan_out, 1), jnp.float32,
                                         minval=-bound, maxval=bound))
    return weights, biases


def reference_forward(x, weights, biases):
    h = x
    for i, (w, b) in enumerate(zip(weights, biases)):
        h = h @ w.T + b[:, 0]
        if i < len(weights) - 1:
            h = jnp.maximum(h, 0.0)
    return jax.nn.sigmoid(h)


if __name__ == "__main__":
    # LinkPredictor(in_channels=16, hidden_channels=32, out_channels=1,
    #               num_layers=3, dropout=0.5) in eval mode.
    in_channels, hidden_channels, out_channels, num_layers = 16, 32, 1, 3

    key = jax.random.PRNGKey(0)
    key, kx1, kx2 = jax.random.split(key, 3)
    weights, biases = init_params(key, in_channels, hidden_channels,
                                  out_channels, num_layers)

    # 1) Small batch (single grid step, padded rows exercised): strict f32 check.
    x_small = jax.random.normal(kx1, (8, in_channels), jnp.float32)
    out = jax.block_until_ready(link_predictor_forward(x_small, weights, biases))
    ref = reference_forward(x_small, weights, biases)
    assert out.shape == (8, out_channels), out.shape
    assert jnp.allclose(out, ref, atol=1e-5, rtol=1e-5), "f32 mismatch vs JAX reference"

    # 2) Batch forcing multiple pipelined grid steps (two-step cap path + ragged
    #    last block): still strict f32 tolerance.
    x_big = jax.random.normal(kx2, (300, in_channels), jnp.float32)
    out_big = jax.block_until_ready(link_predictor_forward(x_big, weights, biases))
    ref_big = reference_forward(x_big, weights, biases)
    assert out_big.shape == (300, out_channels), out_big.shape
    assert jnp.allclose(out_big, ref_big, atol=1e-5, rtol=1e-5), \
        "multi-step mismatch vs JAX reference"

    print("KERNEL_OK")
</pallas_src>

<mosaic_0001>
module attributes {stable_mosaic.version = 11 : i64} {
  func.func @_mlp_kernel(%arg0: i32, %arg1: memref<128x16xf32, #tpu.memory_space<vmem>>, %arg2: memref<32x16xf32, #tpu.memory_space<vmem>>, %arg3: memref<32x1xf32, #tpu.memory_space<vmem>>, %arg4: memref<32x32xf32, #tpu.memory_space<vmem>>, %arg5: memref<32x1xf32, #tpu.memory_space<vmem>>, %arg6: memref<1x32xf32, #tpu.memory_space<vmem>>, %arg7: memref<1x1xf32, #tpu.memory_space<vmem>>, %arg8: memref<1x128xf32, #tpu.memory_space<vmem>>) attributes {dimension_semantics = [#tpu.dimension_semantics<parallel>], iteration_bounds = array<i64: 1>, scalar_prefetch = 0 : i64, scratch_operands = 0 : i64, tpu.core_type = #tpu.core_type<tc>, window_params = [{transform_indices = @transform_0, window_bounds = array<i64: 128, 16>}, {pipeline_mode = #tpu.pipeline_mode<synchronous>, transform_indices = @transform_1, window_bounds = array<i64: 32, 16>}, {pipeline_mode = #tpu.pipeline_mode<synchronous>, transform_indices = @transform_2, window_bounds = array<i64: 32, 1>}, {pipeline_mode = #tpu.pipeline_mode<synchronous>, transform_indices = @transform_3, window_bounds = array<i64: 32, 32>}, {pipeline_mode = #tpu.pipeline_mode<synchronous>, transform_indices = @transform_4, window_bounds = array<i64: 32, 1>}, {pipeline_mode = #tpu.pipeline_mode<synchronous>, transform_indices = @transform_5, window_bounds = array<i64: 1, 32>}, {pipeline_mode = #tpu.pipeline_mode<synchronous>, transform_indices = @transform_6, window_bounds = array<i64: 1, 1>}, {transform_indices = @transform_7, window_bounds = array<i64: 1, 128>}]} {
    %c0 = arith.constant 0 : index
    %c0_0 = arith.constant 0 : index
    %0 = vector.load %arg1[%c0, %c0_0] : memref<128x16xf32, #tpu.memory_space<vmem>>, vector<128x16xf32>
    %1 = tpu.transpose %0, [1, 0] : vector<128x16xf32> -> vector<16x128xf32>
    %c0_1 = arith.constant 0 : index
    %c0_2 = arith.constant 0 : index
    %2 = vector.load %arg3[%c0_1, %c0_2] : memref<32x1xf32, #tpu.memory_space<vmem>>, vector<32x1xf32>
    %c0_3 = arith.constant 0 : index
    %c0_4 = arith.constant 0 : index
    %3 = vector.load %arg2[%c0_3, %c0_4] : memref<32x16xf32, #tpu.memory_space<vmem>>, vector<32x16xf32>
    %cst = arith.constant dense<0.000000e+00> : vector<32x128xf32>
    %4 = tpu.matmul %3, %1, %cst {dimension_numbers = #tpu.dot_dimension_numbers<[1], [0], [0], [1], [0, 0, 1, 1], [], []>} : vector<32x16xf32>, vector<16x128xf32>, vector<32x128xf32> -> vector<32x128xf32>
    %5 = vector.broadcast %2 : vector<32x1xf32> to vector<32x128xf32>
    %6 = arith.addf %4, %5 : vector<32x128xf32>
    %cst_5 = arith.constant 0.000000e+00 : f32
    %7 = vector.broadcast %cst_5 : f32 to vector<32x128xf32>
    %8 = arith.maximumf %6, %7 : vector<32x128xf32>
    %c0_6 = arith.constant 0 : index
    %c0_7 = arith.constant 0 : index
    %9 = vector.load %arg5[%c0_6, %c0_7] : memref<32x1xf32, #tpu.memory_space<vmem>>, vector<32x1xf32>
    %c0_8 = arith.constant 0 : index
    %c0_9 = arith.constant 0 : index
    %10 = vector.load %arg4[%c0_8, %c0_9] : memref<32x32xf32, #tpu.memory_space<vmem>>, vector<32x32xf32>
    %cst_10 = arith.constant dense<0.000000e+00> : vector<32x128xf32>
    %11 = tpu.matmul %10, %8, %cst_10 {dimension_numbers = #tpu.dot_dimension_numbers<[1], [0], [0], [1], [0, 0, 1, 1], [], []>} : vector<32x32xf32>, vector<32x128xf32>, vector<32x128xf32> -> vector<32x128xf32>
    %12 = vector.broadcast %9 : vector<32x1xf32> to vector<32x128xf32>
    %13 = arith.addf %11, %12 : vector<32x128xf32>
    %cst_11 = arith.constant 0.000000e+00 : f32
    %14 = vector.broadcast %cst_11 : f32 to vector<32x128xf32>
    %15 = arith.maximumf %13, %14 : vector<32x128xf32>
    %c0_12 = arith.constant 0 : index
    %c0_13 = arith.constant 0 : index
    %16 = vector.load %arg7[%c0_12, %c0_13] : memref<1x1xf32, #tpu.memory_space<vmem>>, vector<1x1xf32>
    %c0_14 = arith.constant 0 : index
    %c0_15 = arith.constant 0 : index
    %17 = vector.load %arg6[%c0_14, %c0_15] : memref<1x32xf32, #tpu.memory_space<vmem>>, vector<1x32xf32>
    %18 = tpu.transpose %17, [1, 0] : vector<1x32xf32> -> vector<32x1xf32>
    %19 = vector.broadcast %18 : vector<32x1xf32> to vector<32x128xf32>
    %20 = arith.mulf %19, %15 : vector<32x128xf32>
    %cst_16 = arith.constant dense<0.000000e+00> : vector<128xf32>
    %21 = vector.multi_reduction <add>, %20, %cst_16 [0] : vector<32x128xf32> to vector<128xf32>
    %22 = vector.shape_cast %21 : vector<128xf32> to vector<1x128xf32>
    %23 = vector.broadcast %16 : vector<1x1xf32> to vector<1x128xf32>
    %24 = arith.addf %22, %23 : vector<1x128xf32>
    %25 = arith.negf %24 : vector<1x128xf32>
    %26 = math.exp %25 : vector<1x128xf32>
    %cst_17 = arith.constant 1.000000e+00 : f32
    %27 = vector.broadcast %cst_17 : f32 to vector<1x128xf32>
    %28 = arith.addf %27, %26 : vector<1x128xf32>
    %29 = arith.divf %27, %28 : vector<1x128xf32>
    %c0_18 = arith.constant 0 : index
    %c0_19 = arith.constant 0 : index
    %30 = vector.load %arg8[%c0_18, %c0_19] : memref<1x128xf32, #tpu.memory_space<vmem>>, vector<1x128xf32>
    tpu.vector_store %arg8[%c0_18, %c0_19], %29 {strides = array<i32>} : memref<1x128xf32, #tpu.memory_space<vmem>>, vector<1x128xf32>,
    return
  }
  func.func @transform_0(%arg0: i32) -> (i32, i32) {
    %c0_i32 = arith.constant 0 : i32
    %c0_i32_0 = arith.constant 0 : i32
    return %arg0, %c0_i32 : i32, i32
  }
  func.func @transform_1(%arg0: i32) -> (i32, i32) {
    %c0_i32 = arith.constant 0 : i32
    %c0_i32_0 = arith.constant 0 : i32
    %c0_i32_1 = arith.constant 0 : i32
    return %c0_i32, %c0_i32_0 : i32, i32
  }
  func.func @transform_2(%arg0: i32) -> (i32, i32) {
    %c0_i32 = arith.constant 0 : i32
    %c0_i32_0 = arith.constant 0 : i32
    %c0_i32_1 = arith.constant 0 : i32
    return %c0_i32, %c0_i32_0 : i32, i32
  }
  func.func @transform_3(%arg0: i32) -> (i32, i32) {
    %c0_i32 = arith.constant 0 : i32
    %c0_i32_0 = arith.constant 0 : i32
    %c0_i32_1 = arith.constant 0 : i32
    return %c0_i32, %c0_i32_0 : i32, i32
  }
  func.func @transform_4(%arg0: i32) -> (i32, i32) {
    %c0_i32 = arith.constant 0 : i32
    %c0_i32_0 = arith.constant 0 : i32
    %c0_i32_1 = arith.constant 0 : i32
    return %c0_i32, %c0_i32_0 : i32, i32
  }
  func.func @transform_5(%arg0: i32) -> (i32, i32) {
    %c0_i32 = arith.constant 0 : i32
    %c0_i32_0 = arith.constant 0 : i32
    %c0_i32_1 = arith.constant 0 : i32
    return %c0_i32, %c0_i32_0 : i32, i32
  }
  func.func @transform_6(%arg0: i32) -> (i32, i32) {
    %c0_i32 = arith.constant 0 : i32
    %c0_i32_0 = arith.constant 0 : i32
    %c0_i32_1 = arith.constant 0 : i32
    return %c0_i32, %c0_i32_0 : i32, i32
  }
  func.func @transform_7(%arg0: i32) -> (i32, i32) {
    %c0_i32 = arith.constant 0 : i32
    %c0_i32_0 = arith.constant 0 : i32
    return %c0_i32, %arg0 : i32, i32
  }
}

</mosaic_0001>

<llo_original>
// kernel: tpu_custom_call.1
$region0: #{tpu_custom_call.1}
  #allocation0 [shape = 'u32[]', space=smem, size = 0x4, offset = 0x4, fixed_abs, tag = 'smem constant byte address 0x4 - core index']
  #allocation1 [shape = 'u32[144,128]{1,0:T(1,128)}', space=vmem, size = 0x12000, scoped, tag = 'internal scratch']
  #allocation2 [shape = 'f32[1,1]{1,0:T(1,128)S(1)}', space=vmem, size = 0x200, scoped, tag = 'scoped memory for tpu_custom_call.1']
  %s0 = inlined_call_operand.vmem [shape: f32[8,16], index: 0, kind: input, shape index: {}]
  %s1 = inlined_call_operand.vmem [shape: f32[32,16], index: 1, kind: input, shape index: {}]
  %s2 = inlined_call_operand.vmem [shape: f32[32,1], index: 2, kind: input, shape index: {}]
  %s3 = inlined_call_operand.vmem [shape: f32[32,32], index: 3, kind: input, shape index: {}]
  %s4 = inlined_call_operand.vmem [shape: f32[32,1], index: 4, kind: input, shape index: {}]
  %s5 = inlined_call_operand.vmem [shape: f32[1,32], index: 5, kind: input, shape index: {}]
  %s6 = inlined_call_operand.<no memory space> [shape: f32[1,1], index: 6, kind: input, shape index: {}]
  %s7 = inlined_call_operand.hbm [shape: f32[1,128], index: 7, kind: output, shape index: {}]
  %s8 = sld [smem:[#allocation0]]
  $region38: #{tpu_custom_call.1} parent=0
    _
  %s10 = ssub.s32 1, %s8
  %s11 = scalar_select 0, %s10, %s8
  %v12 = vstv %s6
  %13 = vst [vmem:[#allocation2] sm:$0x1] %v12
  $region1: #{tpu_custom_call.1} parent=0
    #allocation3 [shape = 'u8[512]{0}', space=vmem, size = 0x400, scoped, tag = 'output window, operand 0, single buffered']
    #allocation4 [shape = 's32[1]{0}', space=sflag, size = 0x4, scoped, tag = 'scoped memory for tpu_custom_call.1']
    %14 = vsyncpa [#allocation4], 0
    // Predicated region
    $region2: #{tpu_custom_call.1} parent=1 // pred_check
      _
    $region3: #{tpu_custom_call.1} parent=1 // pred_check_branch
      %16 = sbr.rel (0) target = $region5
    $region4: #{tpu_custom_call.1} parent=1 // pred_region
      _
    $region5: #{tpu_custom_call.1} parent=1 // pred_fallthru
      _
    // Predicated region
    $region6: #{tpu_custom_call.1} parent=1 // pred_check
      _
    $region7: #{tpu_custom_call.1} parent=1 // pred_check_branch
      %18 = sbr.rel (0) target = $region9
    $region8: #{tpu_custom_call.1} parent=1 // pred_region
      _
    $region9: #{tpu_custom_call.1} parent=1 // pred_fallthru
      _
    // Predicated region
    $region10: #{tpu_custom_call.1} parent=1 // pred_check
      _
    $region11: #{tpu_custom_call.1} parent=1 // pred_check_branch
      %20 = sbr.rel (0) target = $region13
    $region12: #{tpu_custom_call.1} parent=1 // pred_region
      _
    $region13: #{tpu_custom_call.1} parent=1 // pred_fallthru
      _
    // Predicated region
    $region14: #{tpu_custom_call.1} parent=1 // pred_check
      _
    $region15: #{tpu_custom_call.1} parent=1 // pred_check_branch
      %22 = sbr.rel (0) target = $region17
    $region16: #{tpu_custom_call.1} parent=1 // pred_region
      _
    $region17: #{tpu_custom_call.1} parent=1 // pred_fallthru
      _
    // Predicated region
    $region18: #{tpu_custom_call.1} parent=1 // pred_check
      _
    $region19: #{tpu_custom_call.1} parent=1 // pred_check_branch
      %24 = sbr.rel (0) target = $region21
    $region20: #{tpu_custom_call.1} parent=1 // pred_region
      _
    $region21: #{tpu_custom_call.1} parent=1 // pred_fallthru
      _
    // Predicated region
    $region22: #{tpu_custom_call.1} parent=1 // pred_check
      _
    $region23: #{tpu_custom_call.1} parent=1 // pred_check_branch
      %26 = sbr.rel (0) target = $region25
    $region24: #{tpu_custom_call.1} parent=1 // pred_region
      _
    $region25: #{tpu_custom_call.1} parent=1 // pred_fallthru
      _
    // Predicated region
    $region26: #{tpu_custom_call.1} parent=1 // pred_check
      _
    $region27: #{tpu_custom_call.1} parent=1 // pred_check_branch
      %28 = sbr.rel (0) target = $region29
    $region28: #{tpu_custom_call.1} parent=1 // pred_region
      _
    $region29: #{tpu_custom_call.1} parent=1 // pred_fallthru
      _
    %v29 = vld [vmem:[%s0] sm:$0xff]
    %v30 = vld [vmem:[%s0 + $0x8] sm:$0xff]
    %v31 = vld [vmem:[%s0 + $0x10] sm:$0xff]
    %v32 = vld [vmem:[%s0 + $0x18] sm:$0xff]
    %v33 = vld [vmem:[%s0 + $0x20] sm:$0xff]
    %v34 = vld [vmem:[%s0 + $0x28] sm:$0xff]
    %v35 = vld [vmem:[%s0 + $0x30] sm:$0xff]
    %v36 = vld [vmem:[%s0 + $0x38] sm:$0xff]
    %v37 = vld [vmem:[%s0 + $0x40] sm:$0xff]
    %v38 = vld [vmem:[%s0 + $0x48] sm:$0xff]
    %v39 = vld [vmem:[%s0 + $0x50] sm:$0xff]
    %v40 = vld [vmem:[%s0 + $0x58] sm:$0xff]
    %v41 = vld [vmem:[%s0 + $0x60] sm:$0xff]
    %v42 = vld [vmem:[%s0 + $0x68] sm:$0xff]
    %v43 = vld [vmem:[%s0 + $0x70] sm:$0xff]
    %v44 = vld [vmem:[%s0 + $0x78] sm:$0xff]
    %v45 = vld [vmem:[%s2] sm:$0xff]
    %v46 = vld [vmem:[%s2 + $0x8] sm:$0xff]
    %v47 = vld [vmem:[%s2 + $0x10] sm:$0xff]
    %v48 = vld [vmem:[%s2 + $0x18] sm:$0xff]
    %v49 = vld [vmem:[%s1] sm:$0xff]
    %v50 = vld [vmem:[%s1 + $0x8] sm:$0xff]
    %v51 = vld [vmem:[%s1 + $0x10] sm:$0xff]
    %v52 = vld [vmem:[%s1 + $0x18] sm:$0xff]
    %54 = vset.pattern.permute.xlu0 0
    %55 = vperm.xlu0 %54, %v45
    %v56 = vpop.permute.xlu0 %55
    %59 = vset.pattern.permute.xlu0 0
    %60 = vperm.xlu0 %59, %v46
    %v61 = vpop.permute.xlu0 %60
    %64 = vset.pattern.permute.xlu0 0
    %65 = vperm.xlu0 %64, %v47
    %v66 = vpop.permute.xlu0 %65
    %69 = vset.pattern.permute.xlu0 0
    %70 = vperm.xlu0 %69, %v48
    %v71 = vpop.permute.xlu0 %70
    %vm73 = vcmask 130048
    %v75 = vsel %vm73, %v49, 0
    %v78 = vsel %vm73, %v50, 0
    %v81 = vsel %vm73, %v51, 0
    %v84 = vsel %vm73, %v52, 0
    %v87 = vsel %vm73, %v29, 0
    %v90 = vsel %vm73, %v30, 0
    %v93 = vsel %vm73, %v31, 0
    %v96 = vsel %vm73, %v32, 0
    %v99 = vsel %vm73, %v33, 0
    %v102 = vsel %vm73, %v34, 0
    %v105 = vsel %vm73, %v35, 0
    %v108 = vsel %vm73, %v36, 0
    %v111 = vsel %vm73, %v37, 0
    %v114 = vsel %vm73, %v38, 0
    %v117 = vsel %vm73, %v39, 0
    %v120 = vsel %vm73, %v40, 0
    %v123 = vsel %vm73, %v41, 0
    %v126 = vsel %vm73, %v42, 0
    %v129 = vsel %vm73, %v43, 0
    %v132 = vsel %vm73, %v44, 0
    %134 = vmatprep.subr.mxu0 0.0
    %135 = vmatpush1.xpose.msra.mxu0 %v87
    %136 = vmatprep.subr.mxu0 0.0
    %137 = vmatpush1.xpose.msra.mxu0 %v90
    %138 = vmatprep.subr.mxu0 0.0
    %139 = vmatpush1.xpose.msra.mxu0 %v93
    %140 = vmatprep.subr.mxu0 0.0
    %141 = vmatpush1.xpose.msra.mxu0 %v96
    %142 = vmatprep.subr.mxu0 0.0
    %143 = vmatpush1.xpose.msra.mxu0 %v99
    %144 = vmatprep.subr.mxu0 0.0
    %145 = vmatpush1.xpose.msra.mxu0 %v102
    %146 = vmatprep.subr.mxu0 0.0
    %147 = vmatpush1.xpose.msra.mxu0 %v105
    %148 = vmatprep.subr.mxu0 0.0
    %149 = vmatpush1.xpose.msra.mxu0 %v108
    %150 = vmatprep.subr.mxu0 0.0
    %151 = vmatpush1.xpose.msra.mxu0 %v111
    %152 = vmatprep.subr.mxu0 0.0
    %153 = vmatpush1.xpose.msra.mxu0 %v114
    %154 = vmatprep.subr.mxu0 0.0
    %155 = vmatpush1.xpose.msra.mxu0 %v117
    %156 = vmatprep.subr.mxu0 0.0
    %157 = vmatpush1.xpose.msra.mxu0 %v120
    %158 = vmatprep.subr.mxu0 0.0
    %159 = vmatpush1.xpose.msra.mxu0 %v123
    %160 = vmatprep.subr.mxu0 0.0
    %161 = vmatpush1.xpose.msra.mxu0 %v126
    %162 = vmatprep.subr.mxu0 0.0
    %163 = vmatpush1.xpose.msra.mxu0 %v129
    %164 = vmatprep.subr.mxu0 0.0
    %165 = vmatpush1.xpose.msra.mxu0 %v132
    %166 = vmatprep.subr.mxu0 0.0
    %167 = vmatpush1.xpose.msra.mxu0 0.0
    %168 = vmatprep.subr.mxu0 0.0
    %169 = vmatpush1.xpose.msra.mxu0 0.0
    %170 = vmatprep.subr.mxu0 0.0
    %171 = vmatpush1.xpose.msra.mxu0 0.0
    %172 = vmatprep.subr.mxu0 0.0
    %173 = vmatpush1.xpose.msra.mxu0 0.0
    %174 = vmatprep.subr.mxu0 0.0
    %175 = vmatpush1.xpose.msra.mxu0 0.0
    %176 = vmatprep.subr.mxu0 0.0
    %177 = vmatpush1.xpose.msra.mxu0 0.0
    %178 = vmatprep.subr.mxu0 0.0
    %179 = vmatpush1.xpose.msra.mxu0 0.0
    %180 = vmatprep.subr.mxu0 0.0
    %181 = vmatpush1.xpose.msra.mxu0 0.0
    %182 = vmatprep.subr.mxu0 0.0
    %183 = vmatpush1.xpose.msra.mxu0 0.0
    %184 = vmatprep.subr.mxu0 0.0
    %185 = vmatpush1.xpose.msra.mxu0 0.0
    %186 = vmatprep.subr.mxu0 0.0
    %187 = vmatpush1.xpose.msra.mxu0 0.0
    %188 = vmatprep.subr.mxu0 0.0
    %189 = vmatpush1.xpose.msra.mxu0 0.0
    %190 = vmatprep.subr.mxu0 0.0
    %191 = vmatpush1.xpose.msra.mxu0 0.0
    %192 = vmatprep.subr.mxu0 0.0
    %193 = vmatpush1.xpose.msra.mxu0 0.0
    %194 = vmatprep.subr.mxu0 0.0
    %195 = vmatpush1.xpose.msra.mxu0 0.0
    %196 = vmatprep.subr.mxu0 0.0
    %197 = vmatpush1.xpose.msra.mxu0 0.0
    %198 = vmatprep.mubr.f32.mxu0 0.0
    %199 = vmatmul.mubr.f32.gmra.mrb[0].mxu0 %v75
    %v200 = vpop.f32.mrb[0].mxu0
    %v201 = vadd.f32 %v56, %v200
    %v202 = vpop.f32.mrb[0].mxu0
    %203 = vmatprep.mubr.f32.mxu0 0.0
    %204 = vmatmul.mubr.f32.gmra.mrb[0].mxu0 %v78
    %v205 = vpop.f32.mrb[0].mxu0
    %v206 = vadd.f32 %v61, %v205
    %v207 = vpop.f32.mrb[0].mxu0
    %208 = vmatprep.mubr.f32.mxu0 0.0
    %209 = vmatmul.mubr.f32.gmra.mrb[0].mxu0 %v81
    %v210 = vpop.f32.mrb[0].mxu0
    %v211 = vadd.f32 %v66, %v210
    %v212 = vpop.f32.mrb[0].mxu0
    %213 = vmatprep.mubr.f32.mxu0 0.0
    %214 = vmatmul.mubr.f32.gmra.mrb[0].mxu0 %v84
    %v215 = vpop.f32.mrb[0].mxu0
    %v216 = vadd.f32 %v71, %v215
    %v217 = vpop.f32.mrb[0].mxu0
    %218 = vdwg.mxu0
    %v219 = vmax.f32 %v201, 0.0
    %v220 = vmax.f32 %v206, 0.0
    %v221 = vmax.f32 %v211, 0.0
    %v222 = vmax.f32 %v216, 0.0
    %v223 = vld [vmem:[%s4] sm:$0xff]
    %v224 = vld [vmem:[%s4 + $0x8] sm:$0xff]
    %v225 = vld [vmem:[%s4 + $0x10] sm:$0xff]
    %v226 = vld [vmem:[%s4 + $0x18] sm:$0xff]
    %v227 = vld [vmem:[%s3] sm:$0xff]
    %v228 = vld [vmem:[%s3 + $0x8] sm:$0xff]
    %v229 = vld [vmem:[%s3 + $0x10] sm:$0xff]
    %v230 = vld [vmem:[%s3 + $0x18] sm:$0xff]
    %232 = vset.pattern.permute.xlu0 0
    %233 = vperm.xlu0 %232, %v223
    %v234 = vpop.permute.xlu0 %233
    %237 = vset.pattern.permute.xlu0 0
    %238 = vperm.xlu0 %237, %v224
    %v239 = vpop.permute.xlu0 %238
    %242 = vset.pattern.permute.xlu0 0
    %243 = vperm.xlu0 %242, %v225
    %v244 = vpop.permute.xlu0 %243
    %247 = vset.pattern.permute.xlu0 0
    %248 = vperm.xlu0 %247, %v226
    %v249 = vpop.permute.xlu0 %248
    %vm251 = vcmask 261120
    %v253 = vsel %vm251, %v227, 0
    %v256 = vsel %vm251, %v228, 0
    %v259 = vsel %vm251, %v229, 0
    %v262 = vsel %vm251, %v230, 0
    %264 = vmatprep.subr.mxu0 0.0
    %265 = vmatpush1.msra.mxu0 %v219
    %266 = vmatprep.subr.mxu0 0.0
    %267 = vmatpush1.msra.mxu0 %v220
    %268 = vmatprep.subr.mxu0 0.0
    %269 = vmatpush1.msra.mxu0 %v221
    %270 = vmatprep.subr.mxu0 0.0
    %271 = vmatpush1.msra.mxu0 %v222
    %272 = vmatprep.subr.mxu0 0.0
    %273 = vmatpush1.msra.mxu0 0.0
    %274 = vmatprep.subr.mxu0 0.0
    %275 = vmatpush1.msra.mxu0 0.0
    %276 = vmatprep.subr.mxu0 0.0
    %277 = vmatpush1.msra.mxu0 0.0
    %278 = vmatprep.subr.mxu0 0.0
    %279 = vmatpush1.msra.mxu0 0.0
    %280 = vmatprep.subr.mxu0 0.0
    %281 = vmatpush1.msra.mxu0 0.0
    %282 = vmatprep.subr.mxu0 0.0
    %283 = vmatpush1.msra.mxu0 0.0
    %284 = vmatprep.subr.mxu0 0.0
    %285 = vmatpush1.msra.mxu0 0.0
    %286 = vmatprep.subr.mxu0 0.0
    %287 = vmatpush1.msra.mxu0 0.0
    %288 = vmatprep.subr.mxu0 0.0
    %289 = vmatpush1.msra.mxu0 0.0
    %290 = vmatprep.subr.mxu0 0.0
    %291 = vmatpush1.msra.mxu0 0.0
    %292 = vmatprep.subr.mxu0 0.0
    %293 = vmatpush1.msra.mxu0 0.0
    %294 = vmatprep.subr.mxu0 0.0
    %295 = vmatpush1.msra.mxu0 0.0
    %296 = vmatprep.subr.mxu0 0.0
    %297 = vmatpush1.msra.mxu0 0.0
    %298 = vmatprep.subr.mxu0 0.0
    %299 = vmatpush1.msra.mxu0 0.0
    %300 = vmatprep.subr.mxu0 0.0
    %301 = vmatpush1.msra.mxu0 0.0
    %302 = vmatprep.subr.mxu0 0.0
    %303 = vmatpush1.msra.mxu0 0.0
    %304 = vmatprep.subr.mxu0 0.0
    %305 = vmatpush1.msra.mxu0 0.0
    %306 = vmatprep.subr.mxu0 0.0
    %307 = vmatpush1.msra.mxu0 0.0
    %308 = vmatprep.subr.mxu0 0.0
    %309 = vmatpush1.msra.mxu0 0.0
    %310 = vmatprep.subr.mxu0 0.0
    %311 = vmatpush1.msra.mxu0 0.0
    %312 = vmatprep.subr.mxu0 0.0
    %313 = vmatpush1.msra.mxu0 0.0
    %314 = vmatprep.subr.mxu0 0.0
    %315 = vmatpush1.msra.mxu0 0.0
    %316 = vmatprep.subr.mxu0 0.0
    %317 = vmatpush1.msra.mxu0 0.0
    %318 = vmatprep.subr.mxu0 0.0
    %319 = vmatpush1.msra.mxu0 0.0
    %320 = vmatprep.subr.mxu0 0.0
    %321 = vmatpush1.msra.mxu0 0.0
    %322 = vmatprep.subr.mxu0 0.0
    %323 = vmatpush1.msra.mxu0 0.0
    %324 = vmatprep.subr.mxu0 0.0
    %325 = vmatpush1.msra.mxu0 0.0
    %326 = vmatprep.subr.mxu0 0.0
    %327 = vmatpush1.msra.mxu0 0.0
    %328 = vmatprep.mubr.f32.mxu0 0.0
    %329 = vmatmul.mubr.f32.gmra.mrb[0].mxu0 %v253
    %v330 = vpop.f32.mrb[0].mxu0
    %v331 = vadd.f32 %v234, %v330
    %v332 = vpop.f32.mrb[0].mxu0
    %333 = vmatprep.mubr.f32.mxu0 0.0
    %334 = vmatmul.mubr.f32.gmra.mrb[0].mxu0 %v256
    %v335 = vpop.f32.mrb[0].mxu0
    %v336 = vadd.f32 %v239, %v335
    %v337 = vpop.f32.mrb[0].mxu0
    %338 = vmatprep.mubr.f32.mxu0 0.0
    %339 = vmatmul.mubr.f32.gmra.mrb[0].mxu0 %v259
    %v340 = vpop.f32.mrb[0].mxu0
    %v341 = vadd.f32 %v244, %v340
    %v342 = vpop.f32.mrb[0].mxu0
    %343 = vmatprep.mubr.f32.mxu0 0.0
    %344 = vmatmul.mubr.f32.gmra.mrb[0].mxu0 %v262
    %v345 = vpop.f32.mrb[0].mxu0
    %v346 = vadd.f32 %v249, %v345
    %v347 = vpop.f32.mrb[0].mxu0
    %348 = vdwg.mxu0
    %v349 = vmax.f32 %v331, 0.0
    %v350 = vmax.f32 %v336, 0.0
    %v351 = vmax.f32 %v341, 0.0
    %v352 = vmax.f32 %v346, 0.0
    %v353 = vld [vmem:[#allocation2] sm:$0x1]
    %v354 = vld [vmem:[%s5] sm:$0x1]
    %355 = vxpose.xlu0.b32.start [1/16] %v354, 128
    %356 = vxpose.xlu0.b32.cont [2/16] 0.0, 128
    %357 = vxpose.xlu0.b32.cont [3/16] 0.0, 128
    %358 = vxpose.xlu0.b32.cont [4/16] 0.0, 128
    %359 = vxpose.xlu0.b32.cont [5/16] 0.0, 128
    %360 = vxpose.xlu0.b32.cont [6/16] 0.0, 128
    %361 = vxpose.xlu0.b32.cont [7/16] 0.0, 128
    %362 = vxpose.xlu0.b32.cont [8/16] 0.0, 128
    %363 = vxpose.xlu0.b32.cont [9/16] 0.0, 128
    %364 = vxpose.xlu0.b32.cont [10/16] 0.0, 128
    %365 = vxpose.xlu0.b32.cont [11/16] 0.0, 128
    %366 = vxpose.xlu0.b32.cont [12/16] 0.0, 128
    %367 = vxpose.xlu0.b32.cont [13/16] 0.0, 128
    %368 = vxpose.xlu0.b32.cont [14/16] 0.0, 128
    %369 = vxpose.xlu0.b32.cont [15/16] 0.0, 128
    %370 = vxpose.xlu0.b32.end [16/16] 0.0, 128
    %v371 = vpop.trf.xlu0
    %v372 = vpop.trf.xlu0
    %v373 = vpop.trf.xlu0
    %v374 = vpop.trf.xlu0
    %v375 = vpop.trf.xlu0
    %v376 = vpop.trf.xlu0
    %v377 = vpop.trf.xlu0
    %v378 = vpop.trf.xlu0
    %v379 = vpop.trf.xlu0
    %v380 = vpop.trf.xlu0
    %v381 = vpop.trf.xlu0
    %v382 = vpop.trf.xlu0
    %v383 = vpop.trf.xlu0
    %v384 = vpop.trf.xlu0
    %v385 = vpop.trf.xlu0
    %v386 = vpop.trf.xlu0
    %388 = vset.pattern.permute.xlu0 0
    %389 = vperm.xlu0 %388, %v371
    %v390 = vpop.permute.xlu0 %389
    %393 = vset.pattern.permute.xlu0 0
    %394 = vperm.xlu0 %393, %v372
    %v395 = vpop.permute.xlu0 %394
    %398 = vset.pattern.permute.xlu0 0
    %399 = vperm.xlu0 %398, %v373
    %v400 = vpop.permute.xlu0 %399
    %403 = vset.pattern.permute.xlu0 0
    %404 = vperm.xlu0 %403, %v374
    %v405 = vpop.permute.xlu0 %404
    %v407 = vmul.f32 %v390, %v349
    %v408 = vmul.f32 %v395, %v350
    %v409 = vmul.f32 %v400, %v351
    %v410 = vmul.f32 %v405, %v352
    %v411 = vadd.f32 %v407, %v408
    %v412 = vadd.f32 %v411, %v409
    %v413 = vadd.f32 %v412, %v410
    %v414 = vrot.slane %v413, 4
    %v415 = vadd.f32 %v413, %v414
    %v416 = vrot.slane %v415, 2
    %v417 = vadd.f32 %v415, %v416
    %v418 = vrot.slane %v417, 1
    %v419 = vadd.f32 %v417, %v418
    %421 = vset.pattern.permute.xlu0 0
    %422 = vperm.xlu0 %421, %v353
    %v423 = vpop.permute.xlu0 %422
    %v425 = vlaneseq
    %v426 = vshrl.u32 %v425, 7
    %v427 = vsub.s32 0, %v426
    %v428 = vrot.slane %v423, %v427
    %v429 = vadd.f32 %v419, %v428
    %v430 = vxor.u32 %v429, 2147483648
    %v431 = vmul.f32 %v430, 1.442695
    %v432 = vpow.pop %v431
    %v433 = vadd.f32 %v432, 1.0
    %v434 = vrcp.pop %v433
    %v435 = vmul.f32 1.0, %v434
    %436 = vst [vmem:[#allocation3] sm:$0x1] %v435
    // Predicated region
    $region30: #{tpu_custom_call.1} parent=1 // pred_check
      _
    $region31: #{tpu_custom_call.1} parent=1 // pred_check_branch
      %438 = sbr.rel (0) target = $region33
    $region32: #{tpu_custom_call.1} parent=1 // pred_region
      %s440 = ssub.s32 16, 16
      %441 = vsyncadd [#allocation4], %s440
      %s443 = sshll.u32 [#allocation3], 4
      %s444 = int_to_ptr.vmem [resolvable:$true] %s443
      %446 = dma.vmem_to_hbm [thread:$0]  %s444, 16, %s7, [#allocation4]
    $region33: #{tpu_custom_call.1} parent=1 // pred_fallthru
      _
    // Predicated region
    $region34: #{tpu_custom_call.1} parent=1 // pred_check
      _
    $region35: #{tpu_custom_call.1} parent=1 // pred_check_branch
      %448 = sbr.rel (0) target = $region37
    $region36: #{tpu_custom_call.1} parent=1 // pred_region
      %449 = dma.done [#allocation4], 16
    $region37: #{tpu_custom_call.1} parent=1 // pred_fallthru
      _
    %450 = vsyncpa [#allocation4], 1

</llo_original>
